<compile_context>
chip_gen: v6e
topology: v6e:2x2x1
jax: 0.10.0
libtpu: 0.0.40
codegen_flags: <defaults>
</compile_context>

<pallas_src>
import functools

import jax
import jax.numpy as jnp
from jax.experimental import pallas as pl
from jax.experimental.pallas import tpu as pltpu

EPS = 1e-8
LANES = 128
SUBLANES = 8
DEFAULT_TILE_ROWS = 1024  # 1024 x 128 x f32 = 512 KiB / input tile (2 MiB dbl-buffered)


def _fidelity_partial_kernel(p_ref, g_ref, out_ref, *, n_valid):
    """Per-tile partial sum of sqrt(p*g + eps).

    p_ref, g_ref: (tile_rows, 128) VMEM tiles (lane-dense).
    out_ref:      (8, 128) f32 lane/sublane-dense partial-sum block.

    Only the last grid step can contain padded / out-of-block garbage, so the
    exact index mask is applied there only (pl.when); all other steps are a
    pure mul + sqrt + sublane-group add stream.
    """
    pid = pl.program_id(0)
    last = pl.num_programs(0) - 1

    p = p_ref[...].astype(jnp.float32)
    g = g_ref[...].astype(jnp.float32)
    rows, lanes = p.shape  # static

    s = jnp.sqrt(p * g + EPS)  # VPU mul/add + EUP sqrt

    # Fold the tile's sublane-groups together: (rows,128) -> (rows/8, 8, 128)
    # -> add over groups -> (8,128).  Pure VPU adds, no cross-lane reduce.
    def fold(x):
        return jnp.sum(x.reshape(rows // SUBLANES, SUBLANES, lanes), axis=0)

    @pl.when(pid != last)
    def _():
        out_ref[...] = fold(s)

    @pl.when(pid == last)
    def _():
        # Mask everything past the真 element count: wrapper zero-padding AND
        # Pallas partial-block garbage (select, so NaN/inf garbage is safe).
        row_idx = jax.lax.broadcasted_iota(jnp.int32, (rows, lanes), 0)
        lane_idx = jax.lax.broadcasted_iota(jnp.int32, (rows, lanes), 1)
        flat_idx = pid * (rows * lanes) + row_idx * lanes + lane_idx
        out_ref[...] = fold(jnp.where(flat_idx < n_valid, s, 0.0))


def fidelity_loss_distortion(p, g, *, tile_rows=DEFAULT_TILE_ROWS):
    """Pallas TPU implementation of Fidelity_Loss_distortion.forward(p, g)."""
    assert p.shape == g.shape and p.ndim == 2, "expected (N, C) inputs"
    n, c = p.shape
    total = n * c

    # ---- flatten to a lane-dense (rows, 128) layout --------------------------
    # Pad only to a multiple of one (8,128) vreg tile (<= 1023 extra elements).
    vreg_elems = SUBLANES * LANES
    padded_total = pl.cdiv(total, vreg_elems) * vreg_elems
    rows = padded_total // LANES  # multiple of 8

    pf = jnp.ravel(p)
    gf = jnp.ravel(g)
    pad = padded_total - total
    if pad:
        pf = jnp.pad(pf, (0, pad))
        gf = jnp.pad(gf, (0, pad))
    pf = pf.reshape(rows, LANES)
    gf = gf.reshape(rows, LANES)

    # Block rows: multiple of 8, no larger than the array.
    tile_rows = max(SUBLANES, min(tile_rows, rows))
    tile_rows = (tile_rows // SUBLANES) * SUBLANES
    num_tiles = pl.cdiv(rows, tile_rows)  # last block may be partial (masked)

    kernel = functools.partial(_fidelity_partial_kernel, n_valid=total)

    # Each grid step writes its own (8,128) partial block -> fully parallel grid
    # (lets v7x split the stream across both TensorCores).
    partials = pl.pallas_call(
        kernel,
        out_shape=jax.ShapeDtypeStruct((num_tiles * SUBLANES, LANES), jnp.float32),
        grid=(num_tiles,),
        in_specs=[
            pl.BlockSpec((tile_rows, LANES), lambda i: (i, 0)),
            pl.BlockSpec((tile_rows, LANES), lambda i: (i, 0)),
        ],
        out_specs=pl.BlockSpec((SUBLANES, LANES), lambda i: (i, 0)),
        compiler_params=pltpu.CompilerParams(
            dimension_semantics=("parallel",),
        ),
    )(pf, gf)

    # Tiny finalize in plain JAX: S = sum of all partials; loss = (N - S)/(N*C).
    s_total = jnp.sum(partials)
    return (jnp.float32(n) - s_total) / jnp.float32(n * c)


def _reference(p, g):
    # Plain-JAX replica of the PyTorch forward, for a sanity check.
    c = p.shape[1]
    s = jnp.sqrt(p.astype(jnp.float32) * g.astype(jnp.float32) + EPS)  # (N, C)
    loss = 1.0 - jnp.sum(s, axis=1)                                    # (N,)
    loss = loss / c
    return jnp.mean(loss)


if __name__ == "__main__":
    key = jax.random.PRNGKey(0)
    k1, k2 = jax.random.split(key)

    N, C = 8, 4  # small shapes: batch=8 samples, 4 distortion classes

    # Deterministic synthetic "probability" inputs (softmax-normalized).
    p = jax.nn.softmax(jax.random.normal(k1, (N, C), dtype=jnp.float32), axis=1)
    g = jax.nn.softmax(jax.random.normal(k2, (N, C), dtype=jnp.float32), axis=1)

    out = fidelity_loss_distortion(p, g)
    out = jax.block_until_ready(out)

    ref = _reference(p, g)
    assert jnp.allclose(out, ref, atol=1e-6, rtol=1e-6), (out, ref)

    # Larger, multi-tile, non-aligned case (partial last block) with bf16 inputs.
    k3, k4 = jax.random.split(k1)
    N2, C2 = 3001, 7
    p2 = jax.nn.softmax(jax.random.normal(k3, (N2, C2), dtype=jnp.float32), axis=1)
    g2 = jax.nn.softmax(jax.random.normal(k4, (N2, C2), dtype=jnp.float32), axis=1)
    out2 = jax.block_until_ready(
        fidelity_loss_distortion(p2.astype(jnp.bfloat16), g2.astype(jnp.bfloat16),
                                 tile_rows=64))
    ref2 = _reference(p2.astype(jnp.bfloat16), g2.astype(jnp.bfloat16))
    assert jnp.allclose(out2, ref2, atol=2e-3, rtol=2e-3), (out2, ref2)

    print("KERNEL_OK")
</pallas_src>

<mosaic_0001>
module attributes {stable_mosaic.version = 11 : i64} {
  func.func @_fidelity_partial_kernel(%arg0: i32, %arg1: memref<8x128xf32, #tpu.memory_space<vmem>>, %arg2: memref<8x128xf32, #tpu.memory_space<vmem>>, %arg3: memref<8x128xf32, #tpu.memory_space<vmem>>) attributes {dimension_semantics = [#tpu.dimension_semantics<parallel>], iteration_bounds = array<i64: 1>, scalar_prefetch = 0 : i64, scratch_operands = 0 : i64, tpu.core_type = #tpu.core_type<tc>, window_params = [{transform_indices = @transform_0, window_bounds = array<i64: 8, 128>}, {transform_indices = @transform_1, window_bounds = array<i64: 8, 128>}, {transform_indices = @transform_2, window_bounds = array<i64: 8, 128>}]} {
    %c0 = arith.constant 0 : index
    %c0_0 = arith.constant 0 : index
    %0 = vector.load %arg1[%c0, %c0_0] : memref<8x128xf32, #tpu.memory_space<vmem>>, vector<8x128xf32>
    %c0_1 = arith.constant 0 : index
    %c0_2 = arith.constant 0 : index
    %1 = vector.load %arg2[%c0_1, %c0_2] : memref<8x128xf32, #tpu.memory_space<vmem>>, vector<8x128xf32>
    %2 = arith.mulf %0, %1 : vector<8x128xf32>
    %cst = arith.constant 9.99999993E-9 : f32
    %3 = vector.broadcast %cst : f32 to vector<8x128xf32>
    %4 = arith.addf %2, %3 : vector<8x128xf32>
    %5 = math.sqrt %4 : vector<8x128xf32>
    %c0_i32 = arith.constant 0 : i32
    %6 = arith.cmpi ne, %arg0, %c0_i32 : i32
    %7 = arith.extui %6 : i1 to i32
    %c0_i32_3 = arith.constant 0 : i32
    %8 = arith.cmpi ne, %7, %c0_i32_3 : i32
    scf.if %8 {
      %12 = vector.shape_cast %5 : vector<8x128xf32> to vector<1x8x128xf32>
      %cst_6 = arith.constant dense<0.000000e+00> : vector<8x128xf32>
      %13 = vector.multi_reduction <add>, %12, %cst_6 [0] : vector<1x8x128xf32> to vector<8x128xf32>
      %c0_7 = arith.constant 0 : index
      %c0_8 = arith.constant 0 : index
      %14 = vector.load %arg3[%c0_7, %c0_8] : memref<8x128xf32, #tpu.memory_space<vmem>>, vector<8x128xf32>
      tpu.vector_store %arg3[%c0_7, %c0_8], %13 {strides = array<i32>} : memref<8x128xf32, #tpu.memory_space<vmem>>, vector<8x128xf32>,
    } else {
    }
    %c0_i32_4 = arith.constant 0 : i32
    %9 = arith.cmpi eq, %arg0, %c0_i32_4 : i32
    %10 = arith.extui %9 : i1 to i32
    %c0_i32_5 = arith.constant 0 : i32
    %11 = arith.cmpi ne, %10, %c0_i32_5 : i32
    scf.if %11 {
      %12 = tpu.iota {dimensions = array<i32: 0>} : vector<8x128xi32>
      %13 = tpu.iota {dimensions = array<i32: 1>} : vector<8x128xi32>
      %c1024_i32 = arith.constant 1024 : i32
      %14 = arith.muli %arg0, %c1024_i32 : i32
      %c128_i32 = arith.constant 128 : i32
      %15 = vector.broadcast %c128_i32 : i32 to vector<8x128xi32>
      %16 = arith.muli %12, %15 : vector<8x128xi32>
      %17 = vector.broadcast %14 : i32 to vector<8x128xi32>
      %18 = arith.addi %17, %16 : vector<8x128xi32>
      %19 = arith.addi %18, %13 : vector<8x128xi32>
      %c32_i32 = arith.constant 32 : i32
      %20 = vector.broadcast %c32_i32 : i32 to vector<8x128xi32>
      %21 = arith.cmpi slt, %19, %20 : vector<8x128xi32>
      %cst_6 = arith.constant 0.000000e+00 : f32
      %22 = vector.broadcast %cst_6 : f32 to vector<8x128xf32>
      %23 = arith.select %21, %5, %22 : vector<8x128xi1>, vector<8x128xf32>
      %24 = vector.shape_cast %23 : vector<8x128xf32> to vector<1x8x128xf32>
      %cst_7 = arith.constant dense<0.000000e+00> : vector<8x128xf32>
      %25 = vector.multi_reduction <add>, %24, %cst_7 [0] : vector<1x8x128xf32> to vector<8x128xf32>
      %c0_8 = arith.constant 0 : index
      %c0_9 = arith.constant 0 : index
      %26 = vector.load %arg3[%c0_8, %c0_9] : memref<8x128xf32, #tpu.memory_space<vmem>>, vector<8x128xf32>
      tpu.vector_store %arg3[%c0_8, %c0_9], %25 {strides = array<i32>} : memref<8x128xf32, #tpu.memory_space<vmem>>, vector<8x128xf32>,
    } else {
    }
    return
  }
  func.func @transform_0(%arg0: i32) -> (i32, i32) {
    %c0_i32 = arith.constant 0 : i32
    %c0_i32_0 = arith.constant 0 : i32
    return %arg0, %c0_i32 : i32, i32
  }
  func.func @transform_1(%arg0: i32) -> (i32, i32) {
    %c0_i32 = arith.constant 0 : i32
    %c0_i32_0 = arith.constant 0 : i32
    return %arg0, %c0_i32 : i32, i32
  }
  func.func @transform_2(%arg0: i32) -> (i32, i32) {
    %c0_i32 = arith.constant 0 : i32
    %c0_i32_0 = arith.constant 0 : i32
    return %arg0, %c0_i32 : i32, i32
  }
}

</mosaic_0001>

<llo_original>
// kernel: tpu_custom_call.1
$region0: #{tpu_custom_call.1}
  #allocation0 [shape = 'u32[]', space=smem, size = 0x4, offset = 0x4, fixed_abs, tag = 'smem constant byte address 0x4 - core index']
  #allocation1 [shape = 'u32[144,128]{1,0:T(1,128)}', space=vmem, size = 0x12000, scoped, tag = 'internal scratch']
  %s0 = inlined_call_operand.hbm [shape: f32[8,128], index: 0, kind: input, shape index: {}]
  %s1 = inlined_call_operand.hbm [shape: f32[8,128], index: 1, kind: input, shape index: {}]
  %s2 = inlined_call_operand.hbm [shape: f32[8,128], index: 2, kind: output, shape index: {}]
  %s3 = sld [smem:[#allocation0]]
  $region34: #{tpu_custom_call.1} parent=0
    _
  %s5 = ssub.s32 1, %s3
  %s6 = scalar_select 0, %s5, %s3
  $region1: #{tpu_custom_call.1} parent=0
    #allocation2 [shape = 'u8[4096]{0}', space=vmem, size = 0x1000, scoped, tag = 'input window, operand 0, single buffered']
    #allocation3 [shape = 's32[1]{0}', space=sflag, size = 0x4, scoped, tag = 'scoped memory for tpu_custom_call.1']
    #allocation4 [shape = 's32[1]{0}', space=sflag, size = 0x4, scoped, tag = 'scoped memory for tpu_custom_call.1']
    #allocation5 [shape = 'u8[4096]{0}', space=vmem, size = 0x1000, scoped, tag = 'input window, operand 1, single buffered']
    #allocation6 [shape = 's32[1]{0}', space=sflag, size = 0x4, scoped, tag = 'scoped memory for tpu_custom_call.1']
    #allocation7 [shape = 'u8[4096]{0}', space=vmem, size = 0x1000, scoped, tag = 'output window, operand 0, single buffered']
    %7 = vsyncpa [#allocation3], 0
    %8 = vsyncpa [#allocation6], 0
    %9 = vsyncpa [#allocation4], 0
    // Predicated region
    $region2: #{tpu_custom_call.1} parent=1 // pred_check
      _
    $region3: #{tpu_custom_call.1} parent=1 // pred_check_branch
      %11 = sbr.rel (0) target = $region5
    $region4: #{tpu_custom_call.1} parent=1 // pred_region
      %s13 = ssub.s32 128, 128
      %14 = vsyncadd [#allocation3], %s13
      %s16 = sshll.u32 [#allocation2], 4
      %s17 = int_to_ptr.vmem [resolvable:$true] %s16
      %19 = dma.hbm_to_vmem [thread:$0]  %s0, 128, %s17, [#allocation3]
    $region5: #{tpu_custom_call.1} parent=1 // pred_fallthru
      _
    // Predicated region
    $region6: #{tpu_custom_call.1} parent=1 // pred_check
      _
    $region7: #{tpu_custom_call.1} parent=1 // pred_check_branch
      %21 = sbr.rel (0) target = $region9
    $region8: #{tpu_custom_call.1} parent=1 // pred_region
      %s23 = ssub.s32 128, 128
      %24 = vsyncadd [#allocation6], %s23
      %s26 = sshll.u32 [#allocation5], 4
      %s27 = int_to_ptr.vmem [resolvable:$true] %s26
      %29 = dma.hbm_to_vmem [thread:$0]  %s1, 128, %s27, [#allocation6]
    $region9: #{tpu_custom_call.1} parent=1 // pred_fallthru
      _
    // Predicated region
    $region10: #{tpu_custom_call.1} parent=1 // pred_check
      _
    $region11: #{tpu_custom_call.1} parent=1 // pred_check_branch
      %31 = sbr.rel (0) target = $region13
    $region12: #{tpu_custom_call.1} parent=1 // pred_region
      %32 = dma.done [#allocation3], 128
    $region13: #{tpu_custom_call.1} parent=1 // pred_fallthru
      _
    // Predicated region
    $region14: #{tpu_custom_call.1} parent=1 // pred_check
      _
    $region15: #{tpu_custom_call.1} parent=1 // pred_check_branch
      %34 = sbr.rel (0) target = $region17
    $region16: #{tpu_custom_call.1} parent=1 // pred_region
      %35 = dma.done [#allocation6], 128
    $region17: #{tpu_custom_call.1} parent=1 // pred_fallthru
      _
    %v36 = vld [vmem:[#allocation2] sm:$0xff]
    %v37 = vld [vmem:[#allocation5] sm:$0xff]
    %v38 = vmul.f32 %v36, %v37
    %v39 = vadd.f32 %v38, 1e-08
    %v40 = vrsqrt.pop %v39
    %v41 = vmul.f32 %v39, %v40
    %vm42 = vcmp.eq.f32.partialorder %v39, inf
    %v43 = vsel %vm42, %v39, %v41
    %vm44 = vcmp.eq.f32.partialorder %v39, 0.0
    %v45 = vand.u32 %v39, 2147483648
    %v46 = vsel %vm44, %v45, %v43
    %p47 = scmp.ne.s32.totalorder 0, 0
    // Predicated region
    $region18: #{tpu_custom_call.1} parent=1 // pred_check
      %p48 = pneg %p47
    $region19: #{tpu_custom_call.1} parent=1 // pred_check_branch
      %50 = sbr.rel (%p48) target = $region21
    $region20: #{tpu_custom_call.1} parent=1 // pred_region
      %v51 = vadd.f32 %v46, 0.0
      %52 = vst [vmem:[#allocation7] sm:$0xff] %v51
    $region21: #{tpu_custom_call.1} parent=1 // pred_fallthru
      _
    %p53 = scmp.eq.s32.totalorder 0, 0
    // Predicated region
    $region22: #{tpu_custom_call.1} parent=1 // pred_check
      %p54 = pneg %p53
    $region23: #{tpu_custom_call.1} parent=1 // pred_check_branch
      %56 = sbr.rel (%p54) target = $region25
    $region24: #{tpu_custom_call.1} parent=1 // pred_region
      %v57 = vlaneseq
      %v58 = vshrl.u32 %v57, 7
      %v59 = vlaneseq
      %v60 = vand.u32 %v59, 127
      %s61 = smul.u32 0, 1024
      %v62 = vmul.u32 %v58, 128
      %v63 = vstv %s61
      %v64 = vadd.s32 %v63, %v62
      %v65 = vadd.s32 %v64, %v60
      %vm66 = vcmp.lt.s32.totalorder %v65, 32
      %v67 = vsel %vm66, %v46, 0.0
      %v68 = vadd.f32 %v67, 0.0
      %69 = vst [vmem:[#allocation7] sm:$0xff] %v68
    $region25: #{tpu_custom_call.1} parent=1 // pred_fallthru
      _
    // Predicated region
    $region26: #{tpu_custom_call.1} parent=1 // pred_check
      _
    $region27: #{tpu_custom_call.1} parent=1 // pred_check_branch
      %71 = sbr.rel (0) target = $region29
    $region28: #{tpu_custom_call.1} parent=1 // pred_region
      %s73 = ssub.s32 128, 128
      %74 = vsyncadd [#allocation4], %s73
      %s76 = sshll.u32 [#allocation7], 4
      %s77 = int_to_ptr.vmem [resolvable:$true] %s76
      %79 = dma.vmem_to_hbm [thread:$0]  %s77, 128, %s2, [#allocation4]
    $region29: #{tpu_custom_call.1} parent=1 // pred_fallthru
      _
    // Predicated region
    $region30: #{tpu_custom_call.1} parent=1 // pred_check
      _
    $region31: #{tpu_custom_call.1} parent=1 // pred_check_branch
      %81 = sbr.rel (0) target = $region33
    $region32: #{tpu_custom_call.1} parent=1 // pred_region
      %82 = dma.done [#allocation4], 128
    $region33: #{tpu_custom_call.1} parent=1 // pred_fallthru
      _
    %83 = vsyncpa [#allocation3], 1
    %84 = vsyncpa [#allocation6], 1
    %85 = vsyncpa [#allocation4], 1

</llo_original>
